<compile_context>
chip_gen: v7x
topology: tpu7x:2x2x1
jax: 0.10.0
libtpu: 0.0.40
codegen_flags: <defaults>
</compile_context>

<pallas_src>
import math
import jax
import jax.numpy as jnp
from jax.experimental import pallas as pl
from jax.experimental.pallas import tpu as pltpu


# --------------------------------------------------------------------------- #
# Helpers
# --------------------------------------------------------------------------- #
def _round_up(x, m):
    return ((x + m - 1) // m) * m


def _sublane_multiple(dtype):
    # f32 -> 8, bf16 -> 16, int8/fp8 -> 32 (packed sublanes)
    return max(8, 32 // max(1, jnp.dtype(dtype).itemsize))


def _vmem_capacity_bytes():
    try:
        info = pltpu.get_tpu_info()
        cap = getattr(info, "vmem_capacity_bytes", None)
        if cap:
            return int(cap)
    except Exception:
        pass
    return 64 << 20  # conservative (v7x-class) fallback


# --------------------------------------------------------------------------- #
# Kernels
# --------------------------------------------------------------------------- #
def _kan_kernel_fullk(x_ref, w_ref, b_ref, o_ref):
    """2-D grid (i, j); the whole contraction dim is resident in the tiles."""
    o_ref[...] = (
        jnp.dot(x_ref[...], w_ref[...], preferred_element_type=jnp.float32)
        + b_ref[...]
    ).astype(o_ref.dtype)


def _kan_kernel_ktiled_f32out(x_ref, w_ref, b_ref, o_ref):
    """3-D grid (i, j, k); f32 output block is the accumulator (no scratch)."""
    k = pl.program_id(2)

    @pl.when(k == 0)
    def _():
        o_ref[...] = jnp.broadcast_to(b_ref[...], o_ref.shape)

    o_ref[...] += jnp.dot(x_ref[...], w_ref[...], preferred_element_type=jnp.float32)


def _kan_kernel_ktiled_acc(x_ref, w_ref, b_ref, o_ref, acc_ref):
    """3-D grid (i, j, k); f32 VMEM scratch accumulator for non-f32 outputs."""
    k = pl.program_id(2)

    @pl.when(k == 0)
    def _():
        acc_ref[...] = jnp.broadcast_to(b_ref[...], acc_ref.shape)

    acc_ref[...] += jnp.dot(x_ref[...], w_ref[...], preferred_element_type=jnp.float32)

    @pl.when(k == pl.num_programs(2) - 1)
    def _():
        o_ref[...] = acc_ref[...].astype(o_ref.dtype)


# --------------------------------------------------------------------------- #
# One-time parameter preparation (host side, per parameter set)
# --------------------------------------------------------------------------- #
def _select_tiles(in_features, out_features, compute_dtype, vmem_budget, block_b_max):
    """Pick (block_n, block_k) fitting the VMEM budget; prefer a full-K stripe."""
    itemsize = jnp.dtype(compute_dtype).itemsize
    out_itemsize = 4  # conservative (f32 output)
    i128 = _round_up(max(in_features, 1), 128)
    o128 = _round_up(max(out_features, 1), 128)

    def fits(bb, bn, bk, with_acc):
        need = (2 * bb * bk * itemsize      # x tiles (double buffered)
                + 2 * bk * bn * itemsize    # weight tiles
                + 2 * bn * 4                # bias tiles
                + 2 * bb * bn * out_itemsize)
        if with_acc:
            need += bb * bn * 4
        return need <= vmem_budget

    # Full-K stripe: 2-D grid, x streamed from HBM exactly once per batch tile.
    for bn in (1024, 512, 256, 128):
        bn = min(bn, o128)
        if fits(block_b_max, bn, i128, False):
            return bn, i128
    # K-tiled fallback (very large in_features).
    for bn in (512, 256, 128):
        bn = min(bn, o128)
        for bk in (2048, 1024, 512, 256, 128):
            bk = min(bk, i128)
            if fits(block_b_max, bn, bk, True):
                return bn, bk
    return 128, 128


def prepare_kan_linear(base_w, base_b, spline_w, *, grid_size=5, spline_order=3,
                       compute_dtype=jnp.bfloat16, block_b_max=512,
                       block_n=None, block_k=None, vmem_budget=None):
    """Fold the batch-invariant spline term into the bias, transpose + zero-pad
    the weight once, and pick a generation-aware tile configuration."""
    O, I = base_w.shape
    S = grid_size + spline_order
    assert spline_w.shape == (O, S), "expected shared spline weight (out_features, S)"

    # fused bias = base bias + linspace(0,1,S) @ W_spline^T   (f32, host side, once)
    spline_input = jnp.linspace(0.0, 1.0, S, dtype=jnp.float32)
    fused_bias = base_b.astype(jnp.float32) + spline_input @ spline_w.astype(jnp.float32).T

    vmem_cap = _vmem_capacity_bytes()
    if vmem_budget is None:
        # ~96 MiB on 128-MiB chips (v5e/v6e), ~48 MiB on 64-MiB chips (v7x)
        vmem_budget = min(int(vmem_cap * 0.75), 100 << 20)

    auto_n, auto_k = _select_tiles(I, O, compute_dtype, vmem_budget, block_b_max)
    block_n = auto_n if block_n is None else _round_up(block_n, 128)
    block_k = auto_k if block_k is None else _round_up(block_k, 128)

    I_pad = _round_up(max(I, 1), block_k)
    O_pad = _round_up(max(O, 1), block_n)

    # Pre-transposed, zero-padded weight (done once; weights are static).
    wt = jnp.zeros((I_pad, O_pad), compute_dtype).at[:I, :O].set(
        base_w.T.astype(compute_dtype))
    bias = jnp.zeros((1, O_pad), jnp.float32).at[0, :O].set(fused_bias)

    return dict(wt=wt, bias=bias, in_features=I, out_features=O,
                block_n=block_n, block_k=block_k, block_b_max=block_b_max,
                compute_dtype=jnp.dtype(compute_dtype),
                vmem_budget=vmem_budget, vmem_cap=vmem_cap)


# --------------------------------------------------------------------------- #
# Forward
# --------------------------------------------------------------------------- #
def kan_linear_forward(x, prepared):
    B, I = x.shape
    assert I == prepared["in_features"], "in_features mismatch"
    O = prepared["out_features"]
    wt, bias = prepared["wt"], prepared["bias"]
    I_pad, O_pad = wt.shape
    compute_dtype = prepared["compute_dtype"]
    block_k = prepared["block_k"]
    block_n = prepared["block_n"]
    out_dtype = x.dtype

    sub = _sublane_multiple(compute_dtype)
    block_b = min(prepared["block_b_max"], _round_up(B, sub))
    B_pad = _round_up(B, block_b)

    # v7x has 2 TensorCores per chip: make sure the parallel axes expose >= 2 blocks.
    dual_core_likely = prepared["vmem_cap"] <= (64 << 20)
    if dual_core_likely and (B_pad // block_b) * (O_pad // block_n) < 2:
        if block_n >= 256:
            block_n //= 2          # O_pad is a multiple of the original block_n
        elif block_b >= 2 * sub:
            block_b = _round_up(block_b // 2, sub)
            B_pad = _round_up(B, block_b)

    # Pad / cast x only when strictly necessary (zero fill in K keeps the dot exact).
    if B_pad == B and I_pad == I and x.dtype == compute_dtype:
        x_p = x
    else:
        x_p = jnp.zeros((B_pad, I_pad), compute_dtype).at[:B, :I].set(
            x.astype(compute_dtype))

    full_k = (block_k == I_pad)
    n_k = I_pad // block_k

    itemsize = jnp.dtype(compute_dtype).itemsize
    cost = pl.CostEstimate(
        flops=2 * B_pad * I_pad * O_pad,
        transcendentals=0,
        bytes_accessed=(B_pad * I_pad * itemsize
                        + I_pad * O_pad * itemsize * (B_pad // block_b)
                        + B_pad * O_pad * jnp.dtype(out_dtype).itemsize
                        + O_pad * 4),
    )
    compiler_params = pltpu.CompilerParams(
        dimension_semantics=("parallel", "parallel") if full_k
        else ("parallel", "parallel", "arbitrary"),
        vmem_limit_bytes=prepared["vmem_budget"],
    )

    if full_k:
        grid = (B_pad // block_b, O_pad // block_n)
        out = pl.pallas_call(
            _kan_kernel_fullk,
            out_shape=jax.ShapeDtypeStruct((B_pad, O_pad), out_dtype),
            grid_spec=pltpu.PrefetchScalarGridSpec(
                num_scalar_prefetch=0,
                grid=grid,
                in_specs=[
                    pl.BlockSpec((block_b, block_k), lambda i, j: (i, 0)),   # x stripe
                    pl.BlockSpec((block_k, block_n), lambda i, j: (0, j)),   # W^T stripe
                    pl.BlockSpec((1, block_n), lambda i, j: (0, j)),         # fused bias
                ],
                out_specs=pl.BlockSpec((block_b, block_n), lambda i, j: (i, j)),
            ),
            compiler_params=compiler_params,
            cost_estimate=cost,
        )(x_p, wt, bias)
    else:
        grid = (B_pad // block_b, O_pad // block_n, n_k)
        in_specs = [
            pl.BlockSpec((block_b, block_k), lambda i, j, k: (i, k)),
            pl.BlockSpec((block_k, block_n), lambda i, j, k: (k, j)),
            pl.BlockSpec((1, block_n), lambda i, j, k: (0, j)),
        ]
        out_spec = pl.BlockSpec((block_b, block_n), lambda i, j, k: (i, j))
        if out_dtype == jnp.float32:
            kernel, scratch = _kan_kernel_ktiled_f32out, []
        else:
            kernel = _kan_kernel_ktiled_acc
            scratch = [pltpu.VMEM((block_b, block_n), jnp.float32)]
        out = pl.pallas_call(
            kernel,
            out_shape=jax.ShapeDtypeStruct((B_pad, O_pad), out_dtype),
            grid_spec=pltpu.PrefetchScalarGridSpec(
                num_scalar_prefetch=0,
                grid=grid,
                in_specs=in_specs,
                out_specs=out_spec,
                scratch_shapes=scratch,
            ),
            compiler_params=compiler_params,
            cost_estimate=cost,
        )(x_p, wt, bias)

    if B_pad != B or O_pad != O:
        out = out[:B, :O]
    return out


# --------------------------------------------------------------------------- #
# Pure-JAX reference + init
# --------------------------------------------------------------------------- #
def kan_linear_ref(x, base_w, base_b, spline_w, *, grid_size=5, spline_order=3):
    S = grid_size + spline_order
    s = jnp.linspace(0.0, 1.0, S, dtype=jnp.float32)
    base = (x.astype(jnp.float32) @ base_w.astype(jnp.float32).T
            + base_b[None, :].astype(jnp.float32))
    spline = s @ spline_w.astype(jnp.float32).T  # (O,)
    return base + spline[None, :]


def init_params(key, in_features, out_features, grid_size=5, spline_order=3):
    """Mirrors reset_parameters(): kaiming_uniform_(a=sqrt(5)) ->
       U(-1/sqrt(fan_in), 1/sqrt(fan_in))."""
    S = grid_size + spline_order
    k_w, k_b, k_s = jax.random.split(key, 3)
    bw_bound = 1.0 / math.sqrt(in_features)
    base_w = jax.random.uniform(k_w, (out_features, in_features), jnp.float32,
                                minval=-bw_bound, maxval=bw_bound)
    base_b = jax.random.uniform(k_b, (out_features,), jnp.float32,
                                minval=-bw_bound, maxval=bw_bound)
    sw_bound = 1.0 / math.sqrt(S)
    spline_w = jax.random.uniform(k_s, (out_features, S), jnp.float32,
                                  minval=-sw_bound, maxval=sw_bound)
    return base_w, base_b, spline_w


if __name__ == "__main__":
    GRID_SIZE, SPLINE_ORDER = 5, 3
    key = jax.random.PRNGKey(0)

    # ---- Test 1: small, single-tile, f32 compute (tight tolerance, full-K path) ----
    B, IN, OUT = 8, 32, 16
    k_params, k_x, key = jax.random.split(key, 3)
    base_w, base_b, spline_w = init_params(k_params, IN, OUT, GRID_SIZE, SPLINE_ORDER)
    x = jax.random.normal(k_x, (B, IN), jnp.float32)

    prep_f32 = prepare_kan_linear(base_w, base_b, spline_w,
                                  grid_size=GRID_SIZE, spline_order=SPLINE_ORDER,
                                  compute_dtype=jnp.float32)
    out = jax.block_until_ready(kan_linear_forward(x, prep_f32))
    ref = kan_linear_ref(x, base_w, base_b, spline_w,
                         grid_size=GRID_SIZE, spline_order=SPLINE_ORDER)
    assert out.shape == (B, OUT)
    assert jnp.allclose(out, ref, rtol=1e-5, atol=1e-5), "mismatch (test 1, f32 full-K)"

    # ---- Test 2: ragged shapes, default bf16 compute (full-K path) ----
    B2, IN2, OUT2 = 24, 200, 150
    k_params2, k_x2, key = jax.random.split(key, 3)
    base_w2, base_b2, spline_w2 = init_params(k_params2, IN2, OUT2, GRID_SIZE, SPLINE_ORDER)
    x2 = jax.random.normal(k_x2, (B2, IN2), jnp.float32)

    prep_bf16 = prepare_kan_linear(base_w2, base_b2, spline_w2,
                                   grid_size=GRID_SIZE, spline_order=SPLINE_ORDER)
    out2 = jax.block_until_ready(kan_linear_forward(x2, prep_bf16))
    ref2 = kan_linear_ref(x2, base_w2, base_b2, spline_w2,
                          grid_size=GRID_SIZE, spline_order=SPLINE_ORDER)
    assert out2.shape == (B2, OUT2)
    assert jnp.allclose(out2, ref2, rtol=2e-2, atol=2e-2), "mismatch (test 2, bf16 full-K)"

    # ---- Test 3: forced K-tiling, f32 output accumulated directly into o_ref ----
    prep_kt = prepare_kan_linear(base_w2, base_b2, spline_w2,
                                 grid_size=GRID_SIZE, spline_order=SPLINE_ORDER,
                                 compute_dtype=jnp.float32,
                                 block_n=128, block_k=128)   # grid (1, 2, 2)
    out3 = jax.block_until_ready(kan_linear_forward(x2, prep_kt))
    assert out3.shape == (B2, OUT2)
    assert jnp.allclose(out3, ref2, rtol=1e-4, atol=1e-4), "mismatch (test 3, K-tiled f32)"

    # ---- Test 4: forced K-tiling with bf16 input/output (scratch-accumulator path) ----
    prep_kt_bf16 = prepare_kan_linear(base_w2, base_b2, spline_w2,
                                      grid_size=GRID_SIZE, spline_order=SPLINE_ORDER,
                                      compute_dtype=jnp.bfloat16,
                                      block_n=128, block_k=128)
    out4 = jax.block_until_ready(
        kan_linear_forward(x2.astype(jnp.bfloat16), prep_kt_bf16))
    assert out4.shape == (B2, OUT2)
    assert jnp.allclose(out4.astype(jnp.float32), ref2, rtol=2.5e-2, atol=2.5e-2), \
        "mismatch (test 4, K-tiled bf16)"

    print("KERNEL_OK")
</pallas_src>

<mosaic_0001>
module attributes {stable_mosaic.version = 11 : i64} {
  func.func @_kan_kernel_fullk(%arg0: i32, %arg1: i32, %arg2: memref<8x128xf32, #tpu.memory_space<vmem>>, %arg3: memref<128x128xf32, #tpu.memory_space<vmem>>, %arg4: memref<1x128xf32, #tpu.memory_space<vmem>>, %arg5: memref<8x128xf32, #tpu.memory_space<vmem>>) attributes {dimension_semantics = [#tpu.dimension_semantics<parallel>, #tpu.dimension_semantics<parallel>], iteration_bounds = array<i64: 1, 1>, scalar_prefetch = 0 : i64, scratch_operands = 0 : i64, tpu.core_type = #tpu.core_type<tc>, window_params = [{transform_indices = @transform_0, window_bounds = array<i64: 8, 128>}, {transform_indices = @transform_1, window_bounds = array<i64: 128, 128>}, {transform_indices = @transform_2, window_bounds = array<i64: 1, 128>}, {transform_indices = @transform_3, window_bounds = array<i64: 8, 128>}]} {
    %c0 = arith.constant 0 : index
    %c0_0 = arith.constant 0 : index
    %0 = vector.load %arg2[%c0, %c0_0] : memref<8x128xf32, #tpu.memory_space<vmem>>, vector<8x128xf32>
    %c0_1 = arith.constant 0 : index
    %c0_2 = arith.constant 0 : index
    %1 = vector.load %arg3[%c0_1, %c0_2] : memref<128x128xf32, #tpu.memory_space<vmem>>, vector<128x128xf32>
    %cst = arith.constant dense<0.000000e+00> : vector<8x128xf32>
    %2 = tpu.matmul %0, %1, %cst {dimension_numbers = #tpu.dot_dimension_numbers<[1], [0], [0], [1], [0, 0, 1, 1], [], []>} : vector<8x128xf32>, vector<128x128xf32>, vector<8x128xf32> -> vector<8x128xf32>
    %c0_3 = arith.constant 0 : index
    %c0_4 = arith.constant 0 : index
    %3 = vector.load %arg4[%c0_3, %c0_4] : memref<1x128xf32, #tpu.memory_space<vmem>>, vector<1x128xf32>
    %4 = vector.broadcast %3 : vector<1x128xf32> to vector<8x128xf32>
    %5 = arith.addf %2, %4 : vector<8x128xf32>
    %c0_5 = arith.constant 0 : index
    %c0_6 = arith.constant 0 : index
    %6 = vector.load %arg5[%c0_5, %c0_6] : memref<8x128xf32, #tpu.memory_space<vmem>>, vector<8x128xf32>
    tpu.vector_store %arg5[%c0_5, %c0_6], %5 {strides = array<i32>} : memref<8x128xf32, #tpu.memory_space<vmem>>, vector<8x128xf32>,
    return
  }
  func.func @transform_0(%arg0: i32, %arg1: i32) -> (i32, i32) {
    %c0_i32 = arith.constant 0 : i32
    %c0_i32_0 = arith.constant 0 : i32
    return %arg0, %c0_i32 : i32, i32
  }
  func.func @transform_1(%arg0: i32, %arg1: i32) -> (i32, i32) {
    %c0_i32 = arith.constant 0 : i32
    %c0_i32_0 = arith.constant 0 : i32
    return %c0_i32, %arg1 : i32, i32
  }
  func.func @transform_2(%arg0: i32, %arg1: i32) -> (i32, i32) {
    %c0_i32 = arith.constant 0 : i32
    %c0_i32_0 = arith.constant 0 : i32
    return %c0_i32, %arg1 : i32, i32
  }
  func.func @transform_3(%arg0: i32, %arg1: i32) -> (i32, i32) {
    %c0_i32 = arith.constant 0 : i32
    return %arg0, %arg1 : i32, i32
  }
}

</mosaic_0001>

<llo_original>
// kernel: tpu_custom_call.1
$region0: #{tpu_custom_call.1}
  #allocation0 [shape = 'u32[]', space=smem, size = 0x4, offset = 0x4, fixed_abs, tag = 'smem constant byte address 0x4 - core index']
  #allocation1 [shape = 'u32[144,128]{1,0:T(1,128)}', space=vmem, size = 0x12000, scoped, tag = 'internal scratch']
  %s0 = inlined_call_operand.hbm [shape: f32[8,128], index: 0, kind: input, shape index: {}]
  %s1 = inlined_call_operand.hbm [shape: f32[128,128], index: 1, kind: input, shape index: {}]
  %s2 = inlined_call_operand.vmem [shape: f32[1,128], index: 2, kind: input, shape index: {}]
  %s3 = inlined_call_operand.hbm [shape: f32[8,128], index: 3, kind: output, shape index: {}]
  %s4 = sld [smem:[#allocation0]]
  $region30: #{tpu_custom_call.1} parent=0
    _
  %s6 = ssub.s32 1, %s4
  %s7 = scalar_select 0, %s6, %s4
  $region1: #{tpu_custom_call.1} parent=0
    #allocation2 [shape = 'u8[4096]{0}', space=vmem, size = 0x1000, scoped, tag = 'input window, operand 0, single buffered']
    #allocation3 [shape = 's32[1]{0}', space=sflag, size = 0x4, scoped, tag = 'scoped memory for tpu_custom_call.1']
    #allocation4 [shape = 's32[1]{0}', space=sflag, size = 0x4, scoped, tag = 'scoped memory for tpu_custom_call.1']
    #allocation5 [shape = 'u8[65536]{0}', space=vmem, size = 0x10000, scoped, tag = 'input window, operand 1, single buffered']
    #allocation6 [shape = 's32[1]{0}', space=sflag, size = 0x4, scoped, tag = 'scoped memory for tpu_custom_call.1']
    #allocation7 [shape = 'u8[4096]{0}', space=vmem, size = 0x1000, scoped, tag = 'output window, operand 0, single buffered']
    %8 = vsyncpa [#allocation3], 0
    %9 = vsyncpa [#allocation6], 0
    %10 = vsyncpa [#allocation4], 0
    // Predicated region
    $region2: #{tpu_custom_call.1} parent=1 // pred_check
      _
    $region3: #{tpu_custom_call.1} parent=1 // pred_check_branch
      %12 = sbr.rel (0) target = $region5
    $region4: #{tpu_custom_call.1} parent=1 // pred_region
      %s14 = ssub.s32 128, 128
      %15 = vsyncadd [#allocation3], %s14
      %s17 = sshll.u32 [#allocation2], 4
      %s18 = int_to_ptr.vmem [resolvable:$true] %s17
      %20 = dma.hbm_to_vmem [thread:$0]  %s0, 128, %s18, [#allocation3]
    $region5: #{tpu_custom_call.1} parent=1 // pred_fallthru
      _
    // Predicated region
    $region6: #{tpu_custom_call.1} parent=1 // pred_check
      _
    $region7: #{tpu_custom_call.1} parent=1 // pred_check_branch
      %22 = sbr.rel (0) target = $region9
    $region8: #{tpu_custom_call.1} parent=1 // pred_region
      %s24 = ssub.s32 2048, 2048
      %25 = vsyncadd [#allocation6], %s24
      %s26 = sshll.u32 [#allocation5], 4
      %s27 = int_to_ptr.vmem [resolvable:$true] %s26
      %32 = dma.hbm_to_vmem [thread:$0]  %s1, 2048, %s27, [#allocation6], 128, 128, 8
    $region9: #{tpu_custom_call.1} parent=1 // pred_fallthru
      _
    // Predicated region
    $region10: #{tpu_custom_call.1} parent=1 // pred_check
      _
    $region11: #{tpu_custom_call.1} parent=1 // pred_check_branch
      %34 = sbr.rel (0) target = $region13
    $region12: #{tpu_custom_call.1} parent=1 // pred_region
      _
    $region13: #{tpu_custom_call.1} parent=1 // pred_fallthru
      _
    // Predicated region
    $region14: #{tpu_custom_call.1} parent=1 // pred_check
      _
    $region15: #{tpu_custom_call.1} parent=1 // pred_check_branch
      %36 = sbr.rel (0) target = $region17
    $region16: #{tpu_custom_call.1} parent=1 // pred_region
      %37 = dma.done [#allocation3], 128
    $region17: #{tpu_custom_call.1} parent=1 // pred_fallthru
      _
    // Predicated region
    $region18: #{tpu_custom_call.1} parent=1 // pred_check
      _
    $region19: #{tpu_custom_call.1} parent=1 // pred_check_branch
      %39 = sbr.rel (0) target = $region21
    $region20: #{tpu_custom_call.1} parent=1 // pred_region
      %40 = dma.done [#allocation6], 2048
    $region21: #{tpu_custom_call.1} parent=1 // pred_fallthru
      _
    %v41 = vld [vmem:[#allocation2] sm:$0xff]
    %v42 = vld [vmem:[#allocation5] sm:$0xff]
    %v43 = vld [vmem:[#allocation5 + $0x8] sm:$0xff]
    %v44 = vld [vmem:[#allocation5 + $0x10] sm:$0xff]
    %v45 = vld [vmem:[#allocation5 + $0x18] sm:$0xff]
    %v46 = vld [vmem:[#allocation5 + $0x20] sm:$0xff]
    %v47 = vld [vmem:[#allocation5 + $0x28] sm:$0xff]
    %v48 = vld [vmem:[#allocation5 + $0x30] sm:$0xff]
    %v49 = vld [vmem:[#allocation5 + $0x38] sm:$0xff]
    %v50 = vld [vmem:[#allocation5 + $0x40] sm:$0xff]
    %v51 = vld [vmem:[#allocation5 + $0x48] sm:$0xff]
    %v52 = vld [vmem:[#allocation5 + $0x50] sm:$0xff]
    %v53 = vld [vmem:[#allocation5 + $0x58] sm:$0xff]
    %v54 = vld [vmem:[#allocation5 + $0x60] sm:$0xff]
    %v55 = vld [vmem:[#allocation5 + $0x68] sm:$0xff]
    %v56 = vld [vmem:[#allocation5 + $0x70] sm:$0xff]
    %v57 = vld [vmem:[#allocation5 + $0x78] sm:$0xff]
    %v58 = vld [vmem:[%s2] sm:$0x1]
    %v60 = vlaneseq
    %v61 = vshrl.u32 %v60, 7
    %v62 = vsub.s32 0, %v61
    %v63 = vrot.slane %v58, %v62
    %65 = vmatprep.subr.mxu0 0.0
    %66 = vmatpush1.msra.mxu0 %v42
    %67 = vmatprep.subr.mxu0 0.0
    %68 = vmatpush1.msra.mxu0 %v43
    %69 = vmatprep.subr.mxu0 0.0
    %70 = vmatpush1.msra.mxu0 %v44
    %71 = vmatprep.subr.mxu0 0.0
    %72 = vmatpush1.msra.mxu0 %v45
    %73 = vmatprep.subr.mxu0 0.0
    %74 = vmatpush1.msra.mxu0 %v46
    %75 = vmatprep.subr.mxu0 0.0
    %76 = vmatpush1.msra.mxu0 %v47
    %77 = vmatprep.subr.mxu0 0.0
    %78 = vmatpush1.msra.mxu0 %v48
    %79 = vmatprep.subr.mxu0 0.0
    %80 = vmatpush1.msra.mxu0 %v49
    %81 = vmatprep.subr.mxu0 0.0
    %82 = vmatpush1.msra.mxu0 %v50
    %83 = vmatprep.subr.mxu0 0.0
    %84 = vmatpush1.msra.mxu0 %v51
    %85 = vmatprep.subr.mxu0 0.0
    %86 = vmatpush1.msra.mxu0 %v52
    %87 = vmatprep.subr.mxu0 0.0
    %88 = vmatpush1.msra.mxu0 %v53
    %89 = vmatprep.subr.mxu0 0.0
    %90 = vmatpush1.msra.mxu0 %v54
    %91 = vmatprep.subr.mxu0 0.0
    %92 = vmatpush1.msra.mxu0 %v55
    %93 = vmatprep.subr.mxu0 0.0
    %94 = vmatpush1.msra.mxu0 %v56
    %95 = vmatprep.subr.mxu0 0.0
    %96 = vmatpush1.msra.mxu0 %v57
    %97 = vmatprep.subr.mxu0 0.0
    %98 = vmatpush1.msra.mxu0 0.0
    %99 = vmatprep.subr.mxu0 0.0
    %100 = vmatpush1.msra.mxu0 0.0
    %101 = vmatprep.subr.mxu0 0.0
    %102 = vmatpush1.msra.mxu0 0.0
    %103 = vmatprep.subr.mxu0 0.0
    %104 = vmatpush1.msra.mxu0 0.0
    %105 = vmatprep.subr.mxu0 0.0
    %106 = vmatpush1.msra.mxu0 0.0
    %107 = vmatprep.subr.mxu0 0.0
    %108 = vmatpush1.msra.mxu0 0.0
    %109 = vmatprep.subr.mxu0 0.0
    %110 = vmatpush1.msra.mxu0 0.0
    %111 = vmatprep.subr.mxu0 0.0
    %112 = vmatpush1.msra.mxu0 0.0
    %113 = vmatprep.subr.mxu0 0.0
    %114 = vmatpush1.msra.mxu0 0.0
    %115 = vmatprep.subr.mxu0 0.0
    %116 = vmatpush1.msra.mxu0 0.0
    %117 = vmatprep.subr.mxu0 0.0
    %118 = vmatpush1.msra.mxu0 0.0
    %119 = vmatprep.subr.mxu0 0.0
    %120 = vmatpush1.msra.mxu0 0.0
    %121 = vmatprep.subr.mxu0 0.0
    %122 = vmatpush1.msra.mxu0 0.0
    %123 = vmatprep.subr.mxu0 0.0
    %124 = vmatpush1.msra.mxu0 0.0
    %125 = vmatprep.subr.mxu0 0.0
    %126 = vmatpush1.msra.mxu0 0.0
    %127 = vmatprep.subr.mxu0 0.0
    %128 = vmatpush1.msra.mxu0 0.0
    %129 = vmatprep.mubr.f32.mxu0 0.0
    %130 = vmatmul.mubr.f32.gmra.mrb[0].mxu0 %v41
    %v131 = vpop.f32.mrb[0].mxu0
    %v132 = vadd.f32 %v63, %v131
    %v133 = vpop.f32.mrb[0].mxu0
    %134 = vdwg.mxu0
    %135 = vst [vmem:[#allocation7] sm:$0xff] %v132
    // Predicated region
    $region22: #{tpu_custom_call.1} parent=1 // pred_check
      _
    $region23: #{tpu_custom_call.1} parent=1 // pred_check_branch
      %137 = sbr.rel (0) target = $region25
    $region24: #{tpu_custom_call.1} parent=1 // pred_region
      %s139 = ssub.s32 128, 128
      %140 = vsyncadd [#allocation4], %s139
      %s142 = sshll.u32 [#allocation7], 4
      %s143 = int_to_ptr.vmem [resolvable:$true] %s142
      %145 = dma.vmem_to_hbm [thread:$0]  %s143, 128, %s3, [#allocation4]
    $region25: #{tpu_custom_call.1} parent=1 // pred_fallthru
      _
    // Predicated region
    $region26: #{tpu_custom_call.1} parent=1 // pred_check
      _
    $region27: #{tpu_custom_call.1} parent=1 // pred_check_branch
      %147 = sbr.rel (0) target = $region29
    $region28: #{tpu_custom_call.1} parent=1 // pred_region
      %148 = dma.done [#allocation4], 128
    $region29: #{tpu_custom_call.1} parent=1 // pred_fallthru
      _
    %149 = vsyncpa [#allocation3], 1
    %150 = vsyncpa [#allocation6], 1
    %151 = vsyncpa [#allocation4], 1

</llo_original>
